<compile_context>
chip_gen: v7x
topology: tpu7x:2x2x1
jax: 0.10.0
libtpu: 0.0.40
codegen_flags: <defaults>
</compile_context>

<pallas_src>
import functools

import jax
import jax.numpy as jnp
from jax.experimental import pallas as pl
from jax.experimental.pallas import tpu as pltpu


def _soft_q_kernel(s_ref, a_ref, w1s_ref, w1a_ref, b1_ref, w2_ref, b2_ref,
                   w3_ref, b3_ref, o_ref):
    cdt = w1s_ref.dtype                       # MXU compute dtype (bf16 default)

    s = s_ref[...].astype(cdt)                # (tm, Ds); no-op if already bf16
    a = a_ref[...].astype(cdt)                # (tm, Da)

    # Layer 1: fused concat as two dots, f32 accumulation, f32 bias + ReLU.
    h1 = (jnp.dot(s, w1s_ref[...], preferred_element_type=jnp.float32)
          + jnp.dot(a, w1a_ref[...], preferred_element_type=jnp.float32)
          + b1_ref[...])
    h1 = jnp.maximum(h1, 0.0).astype(cdt)     # (tm, H)

    # Layer 2.
    h2 = jnp.dot(h1, w2_ref[...], preferred_element_type=jnp.float32) + b2_ref[...]
    h2 = jnp.maximum(h2, 0.0)                 # (tm, H) f32

    # Layer 3: (H -> 1) f32 matmul -> (tm, 1) column written in place.
    q = jnp.dot(h2, w3_ref[...], preferred_element_type=jnp.float32)   # (tm, 1)
    o_ref[...] = (q + b3_ref[0, 0]).astype(o_ref.dtype)


def _cdiv(a, b):
    return -(-a // b)


def _round_up(x, m):
    return _cdiv(x, m) * m


def _select_tile(batch, cap):
    """Batch tile: as large as possible (step overhead dominates this tiny MLP),
    lane/sublane aligned, and sized so large batches split into an even number
    of steps (balances v7x's two TensorCores)."""
    if batch <= 256:
        return _round_up(batch, 16)                 # single tiny tile
    if batch <= cap:
        return _round_up(_cdiv(batch, 2), 128)      # two even steps
    steps = _cdiv(batch, cap)
    steps += steps % 2                              # even step count
    return _round_up(_cdiv(batch, steps), 128)      # always <= cap


def prepare_params(params, state_dim, compute_dtype=jnp.bfloat16):
    """One-time preprocessing (call once, NOT per forward): split w1 for the
    fused concat, pre-cast matmul weights to the MXU dtype, reshape biases."""
    w1, b1, w2, b2, w3, b3 = params
    hidden = w1.shape[1]
    return (
        w1[:state_dim].astype(compute_dtype),       # (Ds, H)
        w1[state_dim:].astype(compute_dtype),       # (Da, H)
        b1.reshape(1, hidden).astype(jnp.float32),  # (1, H)
        w2.astype(compute_dtype),                   # (H, H)
        b2.reshape(1, hidden).astype(jnp.float32),  # (1, H)
        w3.reshape(hidden, 1).astype(jnp.float32),  # (H, 1), final layer in f32
        b3.reshape(1, 1).astype(jnp.float32),       # scalar -> SMEM
    )


@functools.partial(jax.jit, static_argnames=("block_m",))
def soft_q_network_1d(state, action, prepared, *, block_m=4096):
    """Forward pass of SoftQNetwork1D. Returns (B, 1) Q-values (float32)."""
    w1s, w1a, b1r, w2c, b2r, w3c, b3r = prepared
    B, Ds = state.shape
    Da = action.shape[1]
    H = w1s.shape[1]

    tm = _select_tile(B, block_m)
    grid = (_cdiv(B, tm),)          # ragged last block handled by Pallas

    resident = lambda shape: pl.BlockSpec(shape, lambda i: (0, 0))

    return pl.pallas_call(
        _soft_q_kernel,
        out_shape=jax.ShapeDtypeStruct((B, 1), jnp.float32),
        grid=grid,
        in_specs=[
            pl.BlockSpec((tm, Ds), lambda i: (i, 0)),            # state tile
            pl.BlockSpec((tm, Da), lambda i: (i, 0)),            # action tile
            resident((Ds, H)),                                   # w1[:Ds]
            resident((Da, H)),                                   # w1[Ds:]
            resident((1, H)),                                    # b1
            resident((H, H)),                                    # w2
            resident((1, H)),                                    # b2
            resident((H, 1)),                                    # w3
            pl.BlockSpec(memory_space=pltpu.MemorySpace.SMEM),   # b3 scalar
        ],
        out_specs=pl.BlockSpec((tm, 1), lambda i: (i, 0)),       # direct (B,1)
        compiler_params=pltpu.CompilerParams(
            dimension_semantics=("parallel",),        # v7x: shard over 2 TCs
            vmem_limit_bytes=32 * 1024 * 1024,        # > v5e 16 MiB default,
                                                      # within v7x 64 MiB phys
        ),
    )(state, action, w1s, w1a, b1r, w2c, b2r, w3c, b3r)


def init_params(key, state_dim, action_dim, hidden_dim):
    """nn.Linear-style U(-1/sqrt(fan_in), 1/sqrt(fan_in)) init.
    Weights stored as (in_features, out_features); biases as (out_features,)."""
    in_dim = state_dim + action_dim
    ks = jax.random.split(key, 6)

    def linear(kw, kb, fan_in, fan_out):
        bound = 1.0 / jnp.sqrt(jnp.float32(fan_in))
        w = jax.random.uniform(kw, (fan_in, fan_out), jnp.float32, -bound, bound)
        b = jax.random.uniform(kb, (fan_out,), jnp.float32, -bound, bound)
        return w, b

    w1, b1 = linear(ks[0], ks[1], in_dim, hidden_dim)
    w2, b2 = linear(ks[2], ks[3], hidden_dim, hidden_dim)
    w3, b3 = linear(ks[4], ks[5], hidden_dim, 1)
    return (w1, b1, w2, b2, w3, b3)


def reference_forward(state, action, params, compute_dtype=jnp.float32):
    """Pure-JAX reference. With compute_dtype=bfloat16 it mirrors the kernel's
    mixed precision (bf16 MXU operands, f32 accumulation/bias/ReLU, f32 head)."""
    w1, b1, w2, b2, w3, b3 = params
    x = jnp.concatenate([state, action], axis=1)
    h1 = jnp.maximum(
        jnp.dot(x.astype(compute_dtype), w1.astype(compute_dtype),
                preferred_element_type=jnp.float32) + b1[None, :], 0.0)
    h2 = jnp.maximum(
        jnp.dot(h1.astype(compute_dtype), w2.astype(compute_dtype),
                preferred_element_type=jnp.float32) + b2[None, :], 0.0)
    return jnp.dot(h2, w3.reshape(-1, 1)) + b3.reshape(1, 1)


if __name__ == "__main__":
    # Small, module-consistent shapes.
    batch = 8
    state_dim = 16
    action_dim = 8
    hidden_dim = 32

    key = jax.random.PRNGKey(0)
    k_params, k_state, k_action = jax.random.split(key, 3)

    params = init_params(k_params, state_dim, action_dim, hidden_dim)
    # Weight preprocessing is hoisted out of the forward pass (done once).
    prepared = jax.block_until_ready(prepare_params(params, state_dim))

    state = jax.random.normal(k_state, (batch, state_dim), jnp.float32)
    action = jax.random.normal(k_action, (batch, action_dim), jnp.float32)

    q = jax.block_until_ready(soft_q_network_1d(state, action, prepared))
    assert q.shape == (batch, 1)

    # Tight check against a reference that mirrors the kernel's bf16/f32
    # mixed precision (differences limited to f32 accumulation order).
    q_ref_bf16 = jax.block_until_ready(
        reference_forward(state, action, params, compute_dtype=jnp.bfloat16))
    assert jnp.allclose(q, q_ref_bf16, atol=1e-3, rtol=1e-3), (q, q_ref_bf16)

    # Loose sanity check against the pure-f32 module semantics (only bf16
    # input/weight rounding separates the two).
    q_ref_f32 = jax.block_until_ready(
        reference_forward(state, action, params, compute_dtype=jnp.float32))
    assert jnp.allclose(q, q_ref_f32, atol=5e-2, rtol=5e-2), (q, q_ref_f32)

    print("KERNEL_OK")
</pallas_src>

<mosaic_0001>
module attributes {stable_mosaic.version = 11 : i64} {
  func.func @_soft_q_kernel(%arg0: i32, %arg1: memref<16x16xf32, #tpu.memory_space<vmem>>, %arg2: memref<16x8xf32, #tpu.memory_space<vmem>>, %arg3: memref<16x32xbf16, #tpu.memory_space<vmem>>, %arg4: memref<8x32xbf16, #tpu.memory_space<vmem>>, %arg5: memref<1x32xf32, #tpu.memory_space<vmem>>, %arg6: memref<32x32xbf16, #tpu.memory_space<vmem>>, %arg7: memref<1x32xf32, #tpu.memory_space<vmem>>, %arg8: memref<32x1xf32, #tpu.memory_space<vmem>>, %arg9: memref<1x1xf32, #tpu.memory_space<smem>>, %arg10: memref<16x1xf32, #tpu.memory_space<vmem>>) attributes {dimension_semantics = [#tpu.dimension_semantics<parallel>], iteration_bounds = array<i64: 1>, scalar_prefetch = 0 : i64, scratch_operands = 0 : i64, tpu.core_type = #tpu.core_type<tc>, window_params = [{transform_indices = @transform_0, window_bounds = array<i64: 16, 16>}, {transform_indices = @transform_1, window_bounds = array<i64: 16, 8>}, {pipeline_mode = #tpu.pipeline_mode<synchronous>, transform_indices = @transform_2, window_bounds = array<i64: 16, 32>}, {pipeline_mode = #tpu.pipeline_mode<synchronous>, transform_indices = @transform_3, window_bounds = array<i64: 8, 32>}, {pipeline_mode = #tpu.pipeline_mode<synchronous>, transform_indices = @transform_4, window_bounds = array<i64: 1, 32>}, {pipeline_mode = #tpu.pipeline_mode<synchronous>, transform_indices = @transform_5, window_bounds = array<i64: 32, 32>}, {pipeline_mode = #tpu.pipeline_mode<synchronous>, transform_indices = @transform_6, window_bounds = array<i64: 1, 32>}, {pipeline_mode = #tpu.pipeline_mode<synchronous>, transform_indices = @transform_7, window_bounds = array<i64: 32, 1>}, {transform_indices = @transform_8, window_bounds = array<i64: 1, 1>}, {transform_indices = @transform_9, window_bounds = array<i64: 16, 1>}]} {
    %c0 = arith.constant 0 : index
    %c0_0 = arith.constant 0 : index
    %0 = vector.load %arg1[%c0, %c0_0] : memref<16x16xf32, #tpu.memory_space<vmem>>, vector<16x16xf32>
    %1 = arith.truncf %0 : vector<16x16xf32> to vector<16x16xbf16>
    %c0_1 = arith.constant 0 : index
    %c0_2 = arith.constant 0 : index
    %2 = vector.load %arg2[%c0_1, %c0_2] : memref<16x8xf32, #tpu.memory_space<vmem>>, vector<16x8xf32>
    %3 = arith.truncf %2 : vector<16x8xf32> to vector<16x8xbf16>
    %c0_3 = arith.constant 0 : index
    %c0_4 = arith.constant 0 : index
    %4 = vector.load %arg3[%c0_3, %c0_4] : memref<16x32xbf16, #tpu.memory_space<vmem>>, vector<16x32xbf16>
    %cst = arith.constant dense<0.000000e+00> : vector<16x32xf32>
    %5 = tpu.matmul %1, %4, %cst {dimension_numbers = #tpu.dot_dimension_numbers<[1], [0], [0], [1], [0, 0, 1, 1], [], []>} : vector<16x16xbf16>, vector<16x32xbf16>, vector<16x32xf32> -> vector<16x32xf32>
    %c0_5 = arith.constant 0 : index
    %c0_6 = arith.constant 0 : index
    %6 = vector.load %arg4[%c0_5, %c0_6] : memref<8x32xbf16, #tpu.memory_space<vmem>>, vector<8x32xbf16>
    %cst_7 = arith.constant dense<0.000000e+00> : vector<16x32xf32>
    %7 = tpu.matmul %3, %6, %cst_7 {dimension_numbers = #tpu.dot_dimension_numbers<[1], [0], [0], [1], [0, 0, 1, 1], [], []>} : vector<16x8xbf16>, vector<8x32xbf16>, vector<16x32xf32> -> vector<16x32xf32>
    %8 = arith.addf %5, %7 : vector<16x32xf32>
    %c0_8 = arith.constant 0 : index
    %c0_9 = arith.constant 0 : index
    %9 = vector.load %arg5[%c0_8, %c0_9] : memref<1x32xf32, #tpu.memory_space<vmem>>, vector<1x32xf32>
    %10 = vector.broadcast %9 : vector<1x32xf32> to vector<16x32xf32>
    %11 = arith.addf %8, %10 : vector<16x32xf32>
    %cst_10 = arith.constant 0.000000e+00 : f32
    %12 = vector.broadcast %cst_10 : f32 to vector<16x32xf32>
    %13 = arith.maximumf %11, %12 : vector<16x32xf32>
    %14 = arith.truncf %13 : vector<16x32xf32> to vector<16x32xbf16>
    %c0_11 = arith.constant 0 : index
    %c0_12 = arith.constant 0 : index
    %15 = vector.load %arg6[%c0_11, %c0_12] : memref<32x32xbf16, #tpu.memory_space<vmem>>, vector<32x32xbf16>
    %cst_13 = arith.constant dense<0.000000e+00> : vector<16x32xf32>
    %16 = tpu.matmul %14, %15, %cst_13 {dimension_numbers = #tpu.dot_dimension_numbers<[1], [0], [0], [1], [0, 0, 1, 1], [], []>} : vector<16x32xbf16>, vector<32x32xbf16>, vector<16x32xf32> -> vector<16x32xf32>
    %c0_14 = arith.constant 0 : index
    %c0_15 = arith.constant 0 : index
    %17 = vector.load %arg7[%c0_14, %c0_15] : memref<1x32xf32, #tpu.memory_space<vmem>>, vector<1x32xf32>
    %18 = vector.broadcast %17 : vector<1x32xf32> to vector<16x32xf32>
    %19 = arith.addf %16, %18 : vector<16x32xf32>
    %cst_16 = arith.constant 0.000000e+00 : f32
    %20 = vector.broadcast %cst_16 : f32 to vector<16x32xf32>
    %21 = arith.maximumf %19, %20 : vector<16x32xf32>
    %c0_17 = arith.constant 0 : index
    %c0_18 = arith.constant 0 : index
    %22 = vector.load %arg8[%c0_17, %c0_18] : memref<32x1xf32, #tpu.memory_space<vmem>>, vector<32x1xf32>
    %cst_19 = arith.constant dense<0.000000e+00> : vector<16x1xf32>
    %23 = tpu.matmul %21, %22, %cst_19 {dimension_numbers = #tpu.dot_dimension_numbers<[1], [0], [0], [1], [0, 0, 1, 1], [], []>} : vector<16x32xf32>, vector<32x1xf32>, vector<16x1xf32> -> vector<16x1xf32>
    %c0_20 = arith.constant 0 : index
    %c0_21 = arith.constant 0 : index
    %24 = memref.load %arg9[%c0_20, %c0_21] : memref<1x1xf32, #tpu.memory_space<smem>>
    %25 = vector.broadcast %24 : f32 to vector<16x1xf32>
    %26 = arith.addf %23, %25 : vector<16x1xf32>
    %c0_22 = arith.constant 0 : index
    %c0_23 = arith.constant 0 : index
    %27 = vector.load %arg10[%c0_22, %c0_23] : memref<16x1xf32, #tpu.memory_space<vmem>>, vector<16x1xf32>
    tpu.vector_store %arg10[%c0_22, %c0_23], %26 {strides = array<i32>} : memref<16x1xf32, #tpu.memory_space<vmem>>, vector<16x1xf32>,
    return
  }
  func.func @transform_0(%arg0: i32) -> (i32, i32) {
    %c0_i32 = arith.constant 0 : i32
    %c0_i32_0 = arith.constant 0 : i32
    return %arg0, %c0_i32 : i32, i32
  }
  func.func @transform_1(%arg0: i32) -> (i32, i32) {
    %c0_i32 = arith.constant 0 : i32
    %c0_i32_0 = arith.constant 0 : i32
    return %arg0, %c0_i32 : i32, i32
  }
  func.func @transform_2(%arg0: i32) -> (i32, i32) {
    %c0_i32 = arith.constant 0 : i32
    %c0_i32_0 = arith.constant 0 : i32
    %c0_i32_1 = arith.constant 0 : i32
    return %c0_i32, %c0_i32_0 : i32, i32
  }
  func.func @transform_3(%arg0: i32) -> (i32, i32) {
    %c0_i32 = arith.constant 0 : i32
    %c0_i32_0 = arith.constant 0 : i32
    %c0_i32_1 = arith.constant 0 : i32
    return %c0_i32, %c0_i32_0 : i32, i32
  }
  func.func @transform_4(%arg0: i32) -> (i32, i32) {
    %c0_i32 = arith.constant 0 : i32
    %c0_i32_0 = arith.constant 0 : i32
    %c0_i32_1 = arith.constant 0 : i32
    return %c0_i32, %c0_i32_0 : i32, i32
  }
  func.func @transform_5(%arg0: i32) -> (i32, i32) {
    %c0_i32 = arith.constant 0 : i32
    %c0_i32_0 = arith.constant 0 : i32
    %c0_i32_1 = arith.constant 0 : i32
    return %c0_i32, %c0_i32_0 : i32, i32
  }
  func.func @transform_6(%arg0: i32) -> (i32, i32) {
    %c0_i32 = arith.constant 0 : i32
    %c0_i32_0 = arith.constant 0 : i32
    %c0_i32_1 = arith.constant 0 : i32
    return %c0_i32, %c0_i32_0 : i32, i32
  }
  func.func @transform_7(%arg0: i32) -> (i32, i32) {
    %c0_i32 = arith.constant 0 : i32
    %c0_i32_0 = arith.constant 0 : i32
    %c0_i32_1 = arith.constant 0 : i32
    return %c0_i32, %c0_i32_0 : i32, i32
  }
  func.func @transform_8(%arg0: i32) -> (i32, i32) {
    %c0_i32 = arith.constant 0 : i32
    %c0_i32_0 = arith.constant 0 : i32
    %c0_i32_1 = arith.constant 0 : i32
    return %c0_i32, %c0_i32_0 : i32, i32
  }
  func.func @transform_9(%arg0: i32) -> (i32, i32) {
    %c0_i32 = arith.constant 0 : i32
    %c0_i32_0 = arith.constant 0 : i32
    return %arg0, %c0_i32 : i32, i32
  }
}

</mosaic_0001>

<llo_original>
// kernel: soft_q_network_1d.1
$region0: #{soft_q_network_1d.1}
  #allocation0 [shape = 'u32[]', space=smem, size = 0x4, offset = 0x4, fixed_abs, tag = 'smem constant byte address 0x4 - core index']
  #allocation1 [shape = 'u32[144,128]{1,0:T(1,128)}', space=vmem, size = 0x12000, scoped, tag = 'internal scratch']
  #allocation2 [shape = 'f32[1,1]{1,0:T(1,128)S(6)}', space=smem, size = 0x200, scoped, tag = 'scoped memory for soft_q_network_1d.1']
  %s0 = inlined_call_operand.vmem [shape: f32[8,16], index: 0, kind: input, shape index: {}]
  %s1 = inlined_call_operand.vmem [shape: f32[8,8], index: 1, kind: input, shape index: {}]
  %s2 = inlined_call_operand.vmem [shape: bf16[16,32], index: 2, kind: input, shape index: {}]
  %s3 = inlined_call_operand.vmem [shape: bf16[8,32], index: 3, kind: input, shape index: {}]
  %s4 = inlined_call_operand.vmem [shape: f32[1,32], index: 4, kind: input, shape index: {}]
  %s5 = inlined_call_operand.vmem [shape: bf16[32,32], index: 5, kind: input, shape index: {}]
  %s6 = inlined_call_operand.vmem [shape: f32[1,32], index: 6, kind: input, shape index: {}]
  %s7 = inlined_call_operand.vmem [shape: f32[32,1], index: 7, kind: input, shape index: {}]
  %s8 = inlined_call_operand.<no memory space> [shape: f32[1,1], index: 8, kind: input, shape index: {}]
  %s9 = inlined_call_operand.vmem [shape: f32[8,1], index: 9, kind: output, shape index: {}]
  %s10 = sld [smem:[#allocation0]]
  $region80: #{soft_q_network_1d.1} parent=0
    _
  %s12 = ssub.s32 1, %s10
  %s13 = scalar_select 0, %s12, %s10
  %14 = sst [smem:[#allocation2]] %s8
  $region1: #{soft_q_network_1d.1} parent=0
    #allocation3 [shape = 'u8[8192]{0}', space=vmem, size = 0x2000, scoped, tag = 'output window, operand 0, single buffered']
    // Predicated region
    $region2: #{soft_q_network_1d.1} parent=1 // pred_check
      _
    $region3: #{soft_q_network_1d.1} parent=1 // pred_check_branch
      %16 = sbr.rel (0) target = $region5
    $region4: #{soft_q_network_1d.1} parent=1 // pred_region
      _
    $region5: #{soft_q_network_1d.1} parent=1 // pred_fallthru
      _
    // Predicated region
    $region6: #{soft_q_network_1d.1} parent=1 // pred_check
      _
    $region7: #{soft_q_network_1d.1} parent=1 // pred_check_branch
      %18 = sbr.rel (0) target = $region9
    $region8: #{soft_q_network_1d.1} parent=1 // pred_region
      _
    $region9: #{soft_q_network_1d.1} parent=1 // pred_fallthru
      _
    // Predicated region
    $region10: #{soft_q_network_1d.1} parent=1 // pred_check
      _
    $region11: #{soft_q_network_1d.1} parent=1 // pred_check_branch
      %20 = sbr.rel (0) target = $region13
    $region12: #{soft_q_network_1d.1} parent=1 // pred_region
      _
    $region13: #{soft_q_network_1d.1} parent=1 // pred_fallthru
      _
    // Predicated region
    $region14: #{soft_q_network_1d.1} parent=1 // pred_check
      _
    $region15: #{soft_q_network_1d.1} parent=1 // pred_check_branch
      %22 = sbr.rel (0) target = $region17
    $region16: #{soft_q_network_1d.1} parent=1 // pred_region
      _
    $region17: #{soft_q_network_1d.1} parent=1 // pred_fallthru
      _
    // Predicated region
    $region18: #{soft_q_network_1d.1} parent=1 // pred_check
      _
    $region19: #{soft_q_network_1d.1} parent=1 // pred_check_branch
      %24 = sbr.rel (0) target = $region21
    $region20: #{soft_q_network_1d.1} parent=1 // pred_region
      _
    $region21: #{soft_q_network_1d.1} parent=1 // pred_fallthru
      _
    // Predicated region
    $region22: #{soft_q_network_1d.1} parent=1 // pred_check
      _
    $region23: #{soft_q_network_1d.1} parent=1 // pred_check_branch
      %26 = sbr.rel (0) target = $region25
    $region24: #{soft_q_network_1d.1} parent=1 // pred_region
      _
    $region25: #{soft_q_network_1d.1} parent=1 // pred_fallthru
      _
    // Predicated region
    $region26: #{soft_q_network_1d.1} parent=1 // pred_check
      _
    $region27: #{soft_q_network_1d.1} parent=1 // pred_check_branch
      %28 = sbr.rel (0) target = $region29
    $region28: #{soft_q_network_1d.1} parent=1 // pred_region
      _
    $region29: #{soft_q_network_1d.1} parent=1 // pred_fallthru
      _
    // Predicated region
    $region30: #{soft_q_network_1d.1} parent=1 // pred_check
      _
    $region31: #{soft_q_network_1d.1} parent=1 // pred_check_branch
      %30 = sbr.rel (0) target = $region33
    $region32: #{soft_q_network_1d.1} parent=1 // pred_region
      _
    $region33: #{soft_q_network_1d.1} parent=1 // pred_fallthru
      _
    // Predicated region
    $region34: #{soft_q_network_1d.1} parent=1 // pred_check
      _
    $region35: #{soft_q_network_1d.1} parent=1 // pred_check_branch
      %32 = sbr.rel (0) target = $region37
    $region36: #{soft_q_network_1d.1} parent=1 // pred_region
      _
    $region37: #{soft_q_network_1d.1} parent=1 // pred_fallthru
      _
    %v34 = vld [vmem:[%s0] sm:$0xff]
    %v35 = vld [vmem:[%s0 + $0x8] sm:$0xff]
    %v36 = vpack.c.bf16 %v35, %v34
    %v37 = vld [vmem:[%s1] sm:$0xff]
    %v38 = vld [vmem:[%s1 + $0x8] sm:$0xff]
    %v39 = vpack.c.bf16 %v38, %v37
    %v40 = vld [vmem:[%s2] sm:$0xf]
    %v41 = vld [vmem:[%s2 + $0x4] sm:$0xf]
    %v42 = vld [vmem:[%s3] sm:$0xf]
    %vm43 = vcmask 64512
    %v45 = vsel %vm43, %v39, 0
    %vm47 = vcmask 1043456
    %v49 = vsel %vm47, %v42, 0
    %51 = vmatprep.subr.bf16.mxu0 0
    %52 = vmatpush1.bf16.msra.mxu0 %v49
    %53 = vmatprep.subr.bf16.mxu0 0
    %54 = vmatpush1.bf16.msra.mxu0 0
    %55 = vmatprep.subr.bf16.mxu0 0
    %56 = vmatpush1.bf16.msra.mxu0 0
    %57 = vmatprep.subr.bf16.mxu0 0
    %58 = vmatpush1.bf16.msra.mxu0 0
    %59 = vmatprep.subr.bf16.mxu0 0
    %60 = vmatpush1.bf16.msra.mxu0 0
    %61 = vmatprep.subr.bf16.mxu0 0
    %62 = vmatpush1.bf16.msra.mxu0 0
    %63 = vmatprep.subr.bf16.mxu0 0
    %64 = vmatpush1.bf16.msra.mxu0 0
    %65 = vmatprep.subr.bf16.mxu0 0
    %66 = vmatpush1.bf16.msra.mxu0 0
    %67 = vmatprep.subr.bf16.mxu0 0
    %68 = vmatpush1.bf16.msra.mxu0 0
    %69 = vmatprep.subr.bf16.mxu0 0
    %70 = vmatpush1.bf16.msra.mxu0 0
    %71 = vmatprep.subr.bf16.mxu0 0
    %72 = vmatpush1.bf16.msra.mxu0 0
    %73 = vmatprep.subr.bf16.mxu0 0
    %74 = vmatpush1.bf16.msra.mxu0 0
    %75 = vmatprep.subr.bf16.mxu0 0
    %76 = vmatpush1.bf16.msra.mxu0 0
    %77 = vmatprep.subr.bf16.mxu0 0
    %78 = vmatpush1.bf16.msra.mxu0 0
    %79 = vmatprep.subr.bf16.mxu0 0
    %80 = vmatpush1.bf16.msra.mxu0 0
    %81 = vmatprep.subr.bf16.mxu0 0
    %82 = vmatpush1.bf16.msra.mxu0 0
    %83 = vmatprep.mubr.bf16.mxu0 0
    %84 = vmatmul.mubr.bf16.gmra.mrb[0].mxu0 %v45
    %v85 = vpop.f32.mrb[0].mxu0
    %v86 = vadd.f32 0.0, %v85
    %v87 = vpop.f32.mrb[0].mxu0
    %v88 = vpop.f32.mrb[0].mxu0
    %v89 = vadd.f32 0.0, %v88
    %v90 = vpop.f32.mrb[0].mxu0
    %91 = vdwg.mxu0
    %v94 = vunpack.c.l.b16 %v40
    %v95 = vunpack.c.l.b16 %v41
    %v96 = vpack.c.b16 %v95, %v94
    %vm98 = vcmask 130048
    %v100 = vsel %vm98, %v36, 0
    %102 = vmatprep.subr.bf16.mxu0 0
    %103 = vmatpush1.bf16.msra.mxu0 %v96
    %104 = vmatprep.subr.bf16.mxu0 0
    %105 = vmatpush1.bf16.msra.mxu0 0
    %106 = vmatprep.subr.bf16.mxu0 0
    %107 = vmatpush1.bf16.msra.mxu0 0
    %108 = vmatprep.subr.bf16.mxu0 0
    %109 = vmatpush1.bf16.msra.mxu0 0
    %110 = vmatprep.subr.bf16.mxu0 0
    %111 = vmatpush1.bf16.msra.mxu0 0
    %112 = vmatprep.subr.bf16.mxu0 0
    %113 = vmatpush1.bf16.msra.mxu0 0
    %114 = vmatprep.subr.bf16.mxu0 0
    %115 = vmatpush1.bf16.msra.mxu0 0
    %116 = vmatprep.subr.bf16.mxu0 0
    %117 = vmatpush1.bf16.msra.mxu0 0
    %118 = vmatprep.subr.bf16.mxu0 0
    %119 = vmatpush1.bf16.msra.mxu0 0
    %120 = vmatprep.subr.bf16.mxu0 0
    %121 = vmatpush1.bf16.msra.mxu0 0
    %122 = vmatprep.subr.bf16.mxu0 0
    %123 = vmatpush1.bf16.msra.mxu0 0
    %124 = vmatprep.subr.bf16.mxu0 0
    %125 = vmatpush1.bf16.msra.mxu0 0
    %126 = vmatprep.subr.bf16.mxu0 0
    %127 = vmatpush1.bf16.msra.mxu0 0
    %128 = vmatprep.subr.bf16.mxu0 0
    %129 = vmatpush1.bf16.msra.mxu0 0
    %130 = vmatprep.subr.bf16.mxu0 0
    %131 = vmatpush1.bf16.msra.mxu0 0
    %132 = vmatprep.subr.bf16.mxu0 0
    %133 = vmatpush1.bf16.msra.mxu0 0
    %134 = vmatprep.mubr.bf16.mxu0 0
    %135 = vmatmul.mubr.bf16.gmra.mrb[0].mxu0 %v100
    %v136 = vpop.f32.mrb[0].mxu0
    %v137 = vadd.f32 %v86, %v136
    %v138 = vpop.f32.mrb[0].mxu0
    %v139 = vpop.f32.mrb[0].mxu0
    %v140 = vadd.f32 %v89, %v139
    %v141 = vpop.f32.mrb[0].mxu0
    %142 = vdwg.mxu0
    %v143 = vld [vmem:[%s4] sm:$0x1]
    %v145 = vlaneseq
    %v146 = vshrl.u32 %v145, 7
    %v147 = vsub.s32 0, %v146
    %v148 = vrot.slane %v143, %v147
    %v150 = vadd.f32 %v137, %v148
    %v151 = vadd.f32 %v140, %v148
    %v152 = vmax.f32 %v150, 0.0
    %v153 = vmax.f32 %v151, 0.0
    %v154 = vpack.c.bf16 %v153, %v152
    %v155 = vld [vmem:[%s5] sm:$0xf]
    %v156 = vld [vmem:[%s5 + $0x4] sm:$0xf]
    %v157 = vld [vmem:[%s5 + $0x8] sm:$0xf]
    %v158 = vld [vmem:[%s5 + $0xc] sm:$0xf]
    %v159 = vld [vmem:[%s6] sm:$0x1]
    %v161 = vlaneseq
    %v162 = vshrl.u32 %v161, 7
    %v163 = vsub.s32 0, %v162
    %v164 = vrot.slane %v159, %v163
    %v170 = vunpack.c.l.b16 %v155
    %v171 = vunpack.c.l.b16 %v156
    %v172 = vunpack.c.l.b16 %v157
    %v173 = vunpack.c.l.b16 %v158
    %v174 = vpack.c.b16 %v171, %v170
    %v175 = vpack.c.b16 %v173, %v172
    %vm178 = vcmask 261120
    %v180 = vsel %vm178, %v154, 0
    %182 = vmatprep.subr.bf16.mxu0 0
    %183 = vmatpush1.bf16.msra.mxu0 %v174
    %184 = vmatprep.subr.bf16.mxu0 0
    %185 = vmatpush1.bf16.msra.mxu0 %v175
    %186 = vmatprep.subr.bf16.mxu0 0
    %187 = vmatpush1.bf16.msra.mxu0 0
    %188 = vmatprep.subr.bf16.mxu0 0
    %189 = vmatpush1.bf16.msra.mxu0 0
    %190 = vmatprep.subr.bf16.mxu0 0
    %191 = vmatpush1.bf16.msra.mxu0 0
    %192 = vmatprep.subr.bf16.mxu0 0
    %193 = vmatpush1.bf16.msra.mxu0 0
    %194 = vmatprep.subr.bf16.mxu0 0
    %195 = vmatpush1.bf16.msra.mxu0 0
    %196 = vmatprep.subr.bf16.mxu0 0
    %197 = vmatpush1.bf16.msra.mxu0 0
    %198 = vmatprep.subr.bf16.mxu0 0
    %199 = vmatpush1.bf16.msra.mxu0 0
    %200 = vmatprep.subr.bf16.mxu0 0
    %201 = vmatpush1.bf16.msra.mxu0 0
    %202 = vmatprep.subr.bf16.mxu0 0
    %203 = vmatpush1.bf16.msra.mxu0 0
    %204 = vmatprep.subr.bf16.mxu0 0
    %205 = vmatpush1.bf16.msra.mxu0 0
    %206 = vmatprep.subr.bf16.mxu0 0
    %207 = vmatpush1.bf16.msra.mxu0 0
    %208 = vmatprep.subr.bf16.mxu0 0
    %209 = vmatpush1.bf16.msra.mxu0 0
    %210 = vmatprep.subr.bf16.mxu0 0
    %211 = vmatpush1.bf16.msra.mxu0 0
    %212 = vmatprep.subr.bf16.mxu0 0
    %213 = vmatpush1.bf16.msra.mxu0 0
    %214 = vmatprep.mubr.bf16.mxu0 0
    %215 = vmatmul.mubr.bf16.gmra.mrb[0].mxu0 %v180
    %v216 = vpop.f32.mrb[0].mxu0
    %v217 = vadd.f32 %v164, %v216
    %v218 = vpop.f32.mrb[0].mxu0
    %v219 = vpop.f32.mrb[0].mxu0
    %v220 = vadd.f32 %v164, %v219
    %v221 = vpop.f32.mrb[0].mxu0
    %222 = vdwg.mxu0
    %v223 = vmax.f32 %v217, 0.0
    %v224 = vmax.f32 %v220, 0.0
    %v225 = vld [vmem:[%s7] sm:$0xff]
    %v226 = vld [vmem:[%s7 + $0x8] sm:$0xff]
    %v227 = vld [vmem:[%s7 + $0x10] sm:$0xff]
    %v228 = vld [vmem:[%s7 + $0x18] sm:$0xff]
    %s229 = sld [smem:[#allocation2]]
    %v230 = vstv %s229
    %v232 = vsel %vm178, %v223, 0
    %v235 = vsel %vm178, %v224, 0
    %237 = vmatprep.subr.mxu0 0.0
    %238 = vmatpush1.msra.mxu0 %v225
    %239 = vmatprep.subr.mxu0 0.0
    %240 = vmatpush1.msra.mxu0 %v226
    %241 = vmatprep.subr.mxu0 0.0
    %242 = vmatpush1.msra.mxu0 %v227
    %243 = vmatprep.subr.mxu0 0.0
    %244 = vmatpush1.msra.mxu0 %v228
    %245 = vmatprep.subr.mxu0 0.0
    %246 = vmatpush1.msra.mxu0 0.0
    %247 = vmatprep.subr.mxu0 0.0
    %248 = vmatpush1.msra.mxu0 0.0
    %249 = vmatprep.subr.mxu0 0.0
    %250 = vmatpush1.msra.mxu0 0.0
    %251 = vmatprep.subr.mxu0 0.0
    %252 = vmatpush1.msra.mxu0 0.0
    %253 = vmatprep.subr.mxu0 0.0
    %254 = vmatpush1.msra.mxu0 0.0
    %255 = vmatprep.subr.mxu0 0.0
    %256 = vmatpush1.msra.mxu0 0.0
    %257 = vmatprep.subr.mxu0 0.0
    %258 = vmatpush1.msra.mxu0 0.0
    %259 = vmatprep.subr.mxu0 0.0
    %260 = vmatpush1.msra.mxu0 0.0
    %261 = vmatprep.subr.mxu0 0.0
    %262 = vmatpush1.msra.mxu0 0.0
    %263 = vmatprep.subr.mxu0 0.0
    %264 = vmatpush1.msra.mxu0 0.0
    %265 = vmatprep.subr.mxu0 0.0
    %266 = vmatpush1.msra.mxu0 0.0
    %267 = vmatprep.subr.mxu0 0.0
    %268 = vmatpush1.msra.mxu0 0.0
    %269 = vmatprep.subr.mxu0 0.0
    %270 = vmatpush1.msra.mxu0 0.0
    %271 = vmatprep.subr.mxu0 0.0
    %272 = vmatpush1.msra.mxu0 0.0
    %273 = vmatprep.subr.mxu0 0.0
    %274 = vmatpush1.msra.mxu0 0.0
    %275 = vmatprep.subr.mxu0 0.0
    %276 = vmatpush1.msra.mxu0 0.0
    %277 = vmatprep.subr.mxu0 0.0
    %278 = vmatpush1.msra.mxu0 0.0
    %279 = vmatprep.subr.mxu0 0.0
    %280 = vmatpush1.msra.mxu0 0.0
    %281 = vmatprep.subr.mxu0 0.0
    %282 = vmatpush1.msra.mxu0 0.0
    %283 = vmatprep.subr.mxu0 0.0
    %284 = vmatpush1.msra.mxu0 0.0
    %285 = vmatprep.subr.mxu0 0.0
    %286 = vmatpush1.msra.mxu0 0.0
    %287 = vmatprep.subr.mxu0 0.0
    %288 = vmatpush1.msra.mxu0 0.0
    %289 = vmatprep.subr.mxu0 0.0
    %290 = vmatpush1.msra.mxu0 0.0
    %291 = vmatprep.subr.mxu0 0.0
    %292 = vmatpush1.msra.mxu0 0.0
    %293 = vmatprep.subr.mxu0 0.0
    %294 = vmatpush1.msra.mxu0 0.0
    %295 = vmatprep.subr.mxu0 0.0
    %296 = vmatpush1.msra.mxu0 0.0
    %297 = vmatprep.subr.mxu0 0.0
    %298 = vmatpush1.msra.mxu0 0.0
    %299 = vmatprep.subr.mxu0 0.0
    %300 = vmatpush1.msra.mxu0 0.0
    %301 = vmatprep.mubr.f32.mxu0 0.0
    %302 = vmatmul.mubr.f32.gmra.mrb[0].mxu0 %v232
    %v303 = vpop.f32.mrb[0].mxu0
    %v304 = vadd.f32 %v230, %v303
    %v305 = vpop.f32.mrb[0].mxu0
    %306 = vmatprep.mubr.f32.mxu0 0.0
    %307 = vmatmul.mubr.f32.gmra.mrb[0].mxu0 %v235
    %v308 = vpop.f32.mrb[0].mxu0
    %v309 = vadd.f32 %v230, %v308
    %v310 = vpop.f32.mrb[0].mxu0
    %311 = vdwg.mxu0
    %vm312 = vcmask 7168
    %313 = vst.msk [vmem:[#allocation3] sm:$0xff] %vm312, %v304
    %314 = vst.msk [vmem:[#allocation3 + $0x8] sm:$0xff] %vm312, %v309
    // Predicated region
    $region38: #{soft_q_network_1d.1} parent=1 // pred_check
      _
    $region39: #{soft_q_network_1d.1} parent=1 // pred_check_branch
      %316 = sbr.rel (0) target = $region41
    $region40: #{soft_q_network_1d.1} parent=1 // pred_region
      // Predicated region
      $region42: #{soft_q_network_1d.1} parent=40 // pred_check
        _
      $region43: #{soft_q_network_1d.1} parent=40 // pred_check_branch
        %318 = sbr.rel (0) target = $region45
      $region44: #{soft_q_network_1d.1} parent=40 // pred_region
        // Predicated region
        $region46: #{soft_q_network_1d.1} parent=44 // pred_check
          _
        $region47: #{soft_q_network_1d.1} parent=44 // pred_check_branch
          %320 = sbr.rel (0) target = $region49
        $region48: #{soft_q_network_1d.1} parent=44 // pred_region
          // Predicated region
          $region61: #{soft_q_network_1d.1} parent=48 // pred_check
            _
          $region62: #{soft_q_network_1d.1} parent=48 // pred_check_branch
            %335 = sbr.rel (0) target = $region64
          $region63: #{soft_q_network_1d.1} parent=48 // pred_region
            loop: start=0, step=1, limit=1
            $region65: #{soft_q_network_1d.1} parent=63 // loop_pre_header
              _
            $region66: #{soft_q_network_1d.1} parent=63 // loop_header
              %s337 = sphi 0, %s341
              %p338 = scmp.ge.s32.totalorder %s337, 1
              %s342 = sphi [#allocation3], [#allocation3]
              %s343 = sphi %s9, %s9
            $region67: #{soft_q_network_1d.1} parent=63 // loop_header_branch
              %340 = sbr.rel (%p338) target = $region71
            $region68: #{soft_q_network_1d.1} parent=63 // loop_body
              %v344 = vld [vmem:[%s342] sm:$0xff]
              %345 = vst [vmem:[%s343] sm:$0xff] %v344
            $region69: #{soft_q_network_1d.1} parent=63 // loop_footer
              %s341 = sadd.s32 1, %s337
            $region70: #{soft_q_network_1d.1} parent=63 // loop_footer_branch
              %336 = sbr.rel target = $region66
            $region71: #{soft_q_network_1d.1} parent=63 // loop_exit
              _
          $region64: #{soft_q_network_1d.1} parent=48 // pred_fallthru
            _
          // Predicated region
          $region72: #{soft_q_network_1d.1} parent=48 // pred_check
            _
          $region73: #{soft_q_network_1d.1} parent=48 // pred_check_branch
            %347 = sbr.rel target = $region75
          $region74: #{soft_q_network_1d.1} parent=48 // pred_region
            _
          $region75: #{soft_q_network_1d.1} parent=48 // pred_fallthru
            _
        $region49: #{soft_q_network_1d.1} parent=44 // pred_fallthru
          _
        // Predicated region
        $region50: #{soft_q_network_1d.1} parent=44 // pred_check
          _
        $region51: #{soft_q_network_1d.1} parent=44 // pred_check_branch
          %322 = sbr.rel target = $region53
        $region52: #{soft_q_network_1d.1} parent=44 // pred_region
          loop: start=0, step=1, limit=1
          $region54: #{soft_q_network_1d.1} parent=52 // loop_pre_header
            _
          $region55: #{soft_q_network_1d.1} parent=52 // loop_header
            %s325 = sphi 0, %s329
            %p326 = scmp.ge.s32.totalorder %s325, 1
            %s330 = sphi [#allocation3], [#allocation3]
            %s331 = sphi %s9, %s9
          $region56: #{soft_q_network_1d.1} parent=52 // loop_header_branch
            %328 = sbr.rel (%p326) target = $region60
          $region57: #{soft_q_network_1d.1} parent=52 // loop_body
            %v332 = vld [vmem:[%s330] sm:$0xff]
            %333 = vst [vmem:[%s331] sm:$0xff] %v332
          $region58: #{soft_q_network_1d.1} parent=52 // loop_footer
            %s329 = sadd.s32 1, %s325
          $region59: #{soft_q_network_1d.1} parent=52 // loop_footer_branch
            %324 = sbr.rel target = $region55
          $region60: #{soft_q_network_1d.1} parent=52 // loop_exit
            _
        $region53: #{soft_q_network_1d.1} parent=44 // pred_fallthru
          _
      $region45: #{soft_q_network_1d.1} parent=40 // pred_fallthru
        _
      %348 = vnop
    $region41: #{soft_q_network_1d.1} parent=1 // pred_fallthru
      _
    // Predicated region
    $region76: #{soft_q_network_1d.1} parent=1 // pred_check
      _
    $region77: #{soft_q_network_1d.1} parent=1 // pred_check_branch
      %350 = sbr.rel (0) target = $region79
    $region78: #{soft_q_network_1d.1} parent=1 // pred_region
      _
    $region79: #{soft_q_network_1d.1} parent=1 // pred_fallthru
      _

</llo_original>
